<compile_context>
chip_gen: v5e
topology: v5e:2x2
jax: 0.10.0
libtpu: 0.0.40
codegen_flags: <defaults>
</compile_context>

<pallas_src>
import jax
import jax.numpy as jnp
from jax.experimental import pallas as pl
from jax.experimental.pallas import tpu as pltpu


def _make_kernel(use_acc):
    """use_acc=True -> f32 scratch accumulator (non-f32 outputs).
    use_acc=False -> accumulate directly into the resident f32 output block."""

    def kernel(x_ref, w1_ref, b1_ref, w2_ref, b2_ref, o_ref, *scratch):
        # x_ref:  (tm, D)   w1_ref: (D, tk)   b1_ref: (1, tk)
        # w2_ref: (tk, D)   b2_ref: (1, D)    o_ref:  (tm, D)
        acc = scratch[0] if use_acc else o_ref
        k = pl.program_id(1)

        @pl.when(k == 0)
        def _():
            acc[...] = jnp.zeros_like(acc)

        # First matmul: (tm, D) @ (D, tk) -> f32 (tm, tk), then bias + ReLU.
        h = jnp.dot(x_ref[...], w1_ref[...], preferred_element_type=jnp.float32)
        h = jnp.maximum(h + b1_ref[...].astype(jnp.float32), 0.0)
        # dropout (eval mode) == identity
        # TODO(synk): training-mode dropout needs pltpu.prng_seed + stateful_bernoulli.

        # Second matmul: partial contraction over this d_ff chunk, f32 accumulation.
        acc[...] += jnp.dot(h.astype(w2_ref.dtype), w2_ref[...],
                            preferred_element_type=jnp.float32)

        @pl.when(k == pl.num_programs(1) - 1)
        def _():
            if use_acc:
                o_ref[...] = (acc[...] + b2_ref[...].astype(jnp.float32)).astype(o_ref.dtype)
            else:
                o_ref[...] += b2_ref[...].astype(o_ref.dtype)

    return kernel


def _round_up(x, m):
    return -(-x // m) * m


def _vmem_footprint(tm, tk, D, in_itemsize, out_itemsize, needs_acc):
    # Double-buffered input/output tiles (+ small sublane padding on the biases)
    # plus the optional f32 accumulator scratch.
    buf = 2 * in_itemsize * (tm * D + D * tk + 8 * tk + tk * D + 8 * D)
    buf += 2 * out_itemsize * tm * D
    if needs_acc:
        buf += 4 * tm * D
    return buf


def _choose_tiles(M, D, d_ff, in_itemsize, out_itemsize, needs_acc, vmem_budget):
    # tk: lane-aligned; prefer 512/256 (fills the 256-wide v6e/v7x MXU, fewer
    # accumulator read-modify-writes on v5e), 128 as fallback.
    d_ff_pad = d_ff if d_ff % 128 == 0 else _round_up(d_ff, 128)
    tk_cands = [c for c in (512, 256, 128) if d_ff_pad % c == 0] or [d_ff_pad]

    # tm sets arithmetic intensity (weights re-streamed per token tile), so it
    # is maximized first, subject to the VMEM budget.
    tm_cands = (1024, 512, 256, 128, 64, 32, 16, 8)
    m_cap = _round_up(max(M, 8), 8)

    for prefer_two_steps in (True, False):
        for tm in tm_cands:
            if tm > m_cap:
                continue
            # Keep >= 2 token-grid steps when M is big enough, so the 'parallel'
            # token axis feeds both v7x TensorCores.
            if prefer_two_steps and M > 256 and tm >= M:
                continue
            for tk in tk_cands:
                if _vmem_footprint(tm, tk, D, in_itemsize, out_itemsize,
                                   needs_acc) <= vmem_budget:
                    return tm, tk
    return 8, tk_cands[-1]


def feed_forward_block(x, w1, b1, w2, b2, *, tm=None, tk=None):
    """x: (..., d_model) -> (..., d_model).  w1: (d_model, d_ff), w2: (d_ff, d_model)."""
    orig_shape = x.shape
    D = orig_shape[-1]
    d_ff = w1.shape[1]
    M = 1
    for s in orig_shape[:-1]:
        M *= s
    x2d = x.reshape(M, D)

    in_itemsize = x2d.dtype.itemsize
    out_itemsize = in_itemsize
    needs_acc = x2d.dtype != jnp.float32  # f32 output accumulates in place

    # Generation-aware VMEM budget (v7x: 64 MiB per TC; v5e/v6e: 128 MiB).
    try:
        vmem_cap = int(pltpu.get_tpu_info().vmem_capacity_bytes)
    except Exception:
        vmem_cap = 64 << 20  # v7x-safe fallback
    vmem_budget = max(vmem_cap - (8 << 20), 16 << 20)

    auto_tm, auto_tk = _choose_tiles(M, D, d_ff, in_itemsize, out_itemsize,
                                     needs_acc, vmem_budget)
    tm = auto_tm if tm is None else tm
    tk = auto_tk if tk is None else tk

    # Zero-pad the token and d_ff axes up to tile multiples (mathematically
    # exact; padded token rows are sliced off below).
    M_pad = _round_up(M, tm)
    d_ff_pad = _round_up(d_ff, tk)
    if M_pad != M:
        x2d = jnp.pad(x2d, ((0, M_pad - M), (0, 0)))
    if d_ff_pad != d_ff:
        pad = d_ff_pad - d_ff
        w1 = jnp.pad(w1, ((0, 0), (0, pad)))
        b1 = jnp.pad(b1, ((0, pad),))
        w2 = jnp.pad(w2, ((0, pad), (0, 0)))

    b1_2d = b1.reshape(1, d_ff_pad)
    b2_2d = b2.reshape(1, D)

    grid_m = M_pad // tm
    grid_k = d_ff_pad // tk

    footprint = _vmem_footprint(tm, tk, D, in_itemsize, out_itemsize, needs_acc)
    vmem_limit = int(min(max(int(1.25 * footprint) + (2 << 20), 24 << 20),
                         vmem_budget))

    flops = 2 * M_pad * D * d_ff_pad * 2  # two matmuls
    # Weights are re-streamed once per token tile (grid_m times).
    bytes_accessed = int(in_itemsize * (M_pad * D
                                        + grid_m * (2 * D * d_ff_pad + d_ff_pad)
                                        + D)
                         + out_itemsize * M_pad * D)

    kernel = _make_kernel(needs_acc)
    scratch = (pltpu.VMEM((tm, D), jnp.float32),) if needs_acc else ()

    out2d = pl.pallas_call(
        kernel,
        out_shape=jax.ShapeDtypeStruct((M_pad, D), x2d.dtype),
        grid_spec=pltpu.PrefetchScalarGridSpec(
            num_scalar_prefetch=0,
            grid=(grid_m, grid_k),                      # reduction (d_ff) axis last
            in_specs=[
                pl.BlockSpec((tm, D), lambda i, k: (i, 0)),   # x tile (held over k)
                pl.BlockSpec((D, tk), lambda i, k: (0, k)),   # W1 column slab
                pl.BlockSpec((1, tk), lambda i, k: (0, k)),   # b1 slab
                pl.BlockSpec((tk, D), lambda i, k: (k, 0)),   # W2 row slab
                pl.BlockSpec((1, D), lambda i, k: (0, 0)),    # b2
            ],
            out_specs=pl.BlockSpec((tm, D), lambda i, k: (i, 0)),
            scratch_shapes=scratch,
        ),
        compiler_params=pltpu.CompilerParams(
            dimension_semantics=("parallel", "arbitrary"),
            vmem_limit_bytes=vmem_limit),
        cost_estimate=pl.CostEstimate(flops=flops, transcendentals=0,
                                      bytes_accessed=bytes_accessed),
    )(x2d, w1, b1_2d, w2, b2_2d)

    return out2d[:M].reshape(orig_shape)


def reference(x, w1, b1, w2, b2):
    h = jnp.maximum(jnp.einsum("bsd,df->bsf", x, w1) + b1, 0.0)
    return jnp.einsum("bsf,fd->bsd", h, w2) + b2


if __name__ == "__main__":
    # Small but lane-aligned primary shapes (d_model % 128 == 0).
    batch, seq, d_model, d_ff = 2, 64, 128, 256
    key = jax.random.PRNGKey(0)
    kx, k1, k2, k3, k4 = jax.random.split(key, 5)

    x = jax.random.normal(kx, (batch, seq, d_model), dtype=jnp.float32)
    # nn.Linear(d_model, d_ff): weight (d_ff, d_model) -> stored transposed.
    w1 = jax.random.normal(k1, (d_model, d_ff), dtype=jnp.float32) * (1.0 / d_model ** 0.5)
    b1 = jax.random.normal(k2, (d_ff,), dtype=jnp.float32) * 0.01
    w2 = jax.random.normal(k3, (d_ff, d_model), dtype=jnp.float32) * (1.0 / d_ff ** 0.5)
    b2 = jax.random.normal(k4, (d_model,), dtype=jnp.float32) * 0.01

    ref = reference(x, w1, b1, w2, b2)

    # 1) f32 path, auto tiles (accumulates directly into the output block).
    out = jax.block_until_ready(feed_forward_block(x, w1, b1, w2, b2))
    assert out.shape == (batch, seq, d_model)
    assert jnp.allclose(out, ref, atol=1e-3, rtol=1e-3), "f32 mismatch vs reference"

    # 2) Forced multi-block grid (exercises the k-axis accumulation path).
    out_tiled = jax.block_until_ready(feed_forward_block(x, w1, b1, w2, b2, tm=64, tk=128))
    assert jnp.allclose(out_tiled, ref, atol=1e-3, rtol=1e-3), "tiled mismatch vs reference"

    # 3) bf16 path (recommended default: bf16 MXU inputs, f32 accumulation,
    #    half the weight DMA bytes) — uses the f32 scratch accumulator.
    xb, w1b, b1b, w2b, b2b = (a.astype(jnp.bfloat16) for a in (x, w1, b1, w2, b2))
    out_bf16 = jax.block_until_ready(feed_forward_block(xb, w1b, b1b, w2b, b2b))
    assert out_bf16.dtype == jnp.bfloat16
    assert jnp.allclose(out_bf16.astype(jnp.float32), ref, atol=1e-1, rtol=1e-1), \
        "bf16 mismatch vs reference"

    # 4) Ragged shapes (token count and d_ff with no aligned divisor) — exercises
    #    the zero-padding path instead of the old tm=M fallback.
    b2_, s2_, dff2_ = 2, 40, 200
    kx2, k5, k6, k7, k8 = jax.random.split(jax.random.PRNGKey(1), 5)
    x_r = jax.random.normal(kx2, (b2_, s2_, d_model), dtype=jnp.float32)
    w1_r = jax.random.normal(k5, (d_model, dff2_), dtype=jnp.float32) * (1.0 / d_model ** 0.5)
    b1_r = jax.random.normal(k6, (dff2_,), dtype=jnp.float32) * 0.01
    w2_r = jax.random.normal(k7, (dff2_, d_model), dtype=jnp.float32) * (1.0 / dff2_ ** 0.5)
    b2_r = jax.random.normal(k8, (d_model,), dtype=jnp.float32) * 0.01
    ref_r = reference(x_r, w1_r, b1_r, w2_r, b2_r)
    out_r = jax.block_until_ready(feed_forward_block(x_r, w1_r, b1_r, w2_r, b2_r))
    assert out_r.shape == (b2_, s2_, d_model)
    assert jnp.allclose(out_r, ref_r, atol=1e-3, rtol=1e-3), "ragged mismatch vs reference"

    print("KERNEL_OK")
</pallas_src>

<mosaic_0001>
module attributes {stable_mosaic.version = 11 : i64} {
  func.func @kernel(%arg0: i32, %arg1: i32, %arg2: memref<128x128xf32, #tpu.memory_space<vmem>>, %arg3: memref<128x256xf32, #tpu.memory_space<vmem>>, %arg4: memref<1x256xf32, #tpu.memory_space<vmem>>, %arg5: memref<256x128xf32, #tpu.memory_space<vmem>>, %arg6: memref<1x128xf32, #tpu.memory_space<vmem>>, %arg7: memref<128x128xf32, #tpu.memory_space<vmem>>) attributes {dimension_semantics = [#tpu.dimension_semantics<parallel>, #tpu.dimension_semantics<arbitrary>], iteration_bounds = array<i64: 1, 1>, scalar_prefetch = 0 : i64, scratch_operands = 0 : i64, tpu.core_type = #tpu.core_type<tc>, window_params = [{transform_indices = @transform_0, window_bounds = array<i64: 128, 128>}, {transform_indices = @transform_1, window_bounds = array<i64: 128, 256>}, {transform_indices = @transform_2, window_bounds = array<i64: 1, 256>}, {transform_indices = @transform_3, window_bounds = array<i64: 256, 128>}, {pipeline_mode = #tpu.pipeline_mode<synchronous>, transform_indices = @transform_4, window_bounds = array<i64: 1, 128>}, {transform_indices = @transform_5, window_bounds = array<i64: 128, 128>}]} {
    %c0_i32 = arith.constant 0 : i32
    %0 = arith.cmpi eq, %arg1, %c0_i32 : i32
    %1 = arith.extui %0 : i1 to i32
    %c0_i32_0 = arith.constant 0 : i32
    %2 = arith.cmpi ne, %1, %c0_i32_0 : i32
    scf.if %2 {
      %cst_16 = arith.constant 0.000000e+00 : f32
      %19 = vector.broadcast %cst_16 : f32 to vector<128x128xf32>
      %c0_17 = arith.constant 0 : index
      %c0_18 = arith.constant 0 : index
      %20 = vector.load %arg7[%c0_17, %c0_18] : memref<128x128xf32, #tpu.memory_space<vmem>>, vector<128x128xf32>
      tpu.vector_store %arg7[%c0_17, %c0_18], %19 {strides = array<i32>} : memref<128x128xf32, #tpu.memory_space<vmem>>, vector<128x128xf32>,
    } else {
    }
    %c0 = arith.constant 0 : index
    %c0_1 = arith.constant 0 : index
    %3 = vector.load %arg2[%c0, %c0_1] : memref<128x128xf32, #tpu.memory_space<vmem>>, vector<128x128xf32>
    %c0_2 = arith.constant 0 : index
    %c0_3 = arith.constant 0 : index
    %4 = vector.load %arg3[%c0_2, %c0_3] : memref<128x256xf32, #tpu.memory_space<vmem>>, vector<128x256xf32>
    %cst = arith.constant dense<0.000000e+00> : vector<128x256xf32>
    %5 = tpu.matmul %3, %4, %cst {dimension_numbers = #tpu.dot_dimension_numbers<[1], [0], [0], [1], [0, 0, 1, 1], [], []>} : vector<128x128xf32>, vector<128x256xf32>, vector<128x256xf32> -> vector<128x256xf32>
    %c0_4 = arith.constant 0 : index
    %c0_5 = arith.constant 0 : index
    %6 = vector.load %arg4[%c0_4, %c0_5] : memref<1x256xf32, #tpu.memory_space<vmem>>, vector<1x256xf32>
    %7 = vector.broadcast %6 : vector<1x256xf32> to vector<128x256xf32>
    %8 = arith.addf %5, %7 : vector<128x256xf32>
    %cst_6 = arith.constant 0.000000e+00 : f32
    %9 = vector.broadcast %cst_6 : f32 to vector<128x256xf32>
    %10 = arith.maximumf %8, %9 : vector<128x256xf32>
    %c0_7 = arith.constant 0 : index
    %c0_8 = arith.constant 0 : index
    %11 = vector.load %arg7[%c0_7, %c0_8] : memref<128x128xf32, #tpu.memory_space<vmem>>, vector<128x128xf32>
    %c0_9 = arith.constant 0 : index
    %c0_10 = arith.constant 0 : index
    %12 = vector.load %arg5[%c0_9, %c0_10] : memref<256x128xf32, #tpu.memory_space<vmem>>, vector<256x128xf32>
    %cst_11 = arith.constant dense<0.000000e+00> : vector<128x128xf32>
    %13 = tpu.matmul %10, %12, %cst_11 {dimension_numbers = #tpu.dot_dimension_numbers<[1], [0], [0], [1], [0, 0, 1, 1], [], []>} : vector<128x256xf32>, vector<256x128xf32>, vector<128x128xf32> -> vector<128x128xf32>
    %14 = arith.addf %11, %13 : vector<128x128xf32>
    %c0_12 = arith.constant 0 : index
    %c0_13 = arith.constant 0 : index
    %15 = vector.load %arg7[%c0_12, %c0_13] : memref<128x128xf32, #tpu.memory_space<vmem>>, vector<128x128xf32>
    tpu.vector_store %arg7[%c0_12, %c0_13], %14 {strides = array<i32>} : memref<128x128xf32, #tpu.memory_space<vmem>>, vector<128x128xf32>,
    %c0_i32_14 = arith.constant 0 : i32
    %16 = arith.cmpi eq, %arg1, %c0_i32_14 : i32
    %17 = arith.extui %16 : i1 to i32
    %c0_i32_15 = arith.constant 0 : i32
    %18 = arith.cmpi ne, %17, %c0_i32_15 : i32
    scf.if %18 {
      %c0_16 = arith.constant 0 : index
      %c0_17 = arith.constant 0 : index
      %19 = vector.load %arg7[%c0_16, %c0_17] : memref<128x128xf32, #tpu.memory_space<vmem>>, vector<128x128xf32>
      %c0_18 = arith.constant 0 : index
      %c0_19 = arith.constant 0 : index
      %20 = vector.load %arg6[%c0_18, %c0_19] : memref<1x128xf32, #tpu.memory_space<vmem>>, vector<1x128xf32>
      %21 = vector.broadcast %20 : vector<1x128xf32> to vector<128x128xf32>
      %22 = arith.addf %19, %21 : vector<128x128xf32>
      %c0_20 = arith.constant 0 : index
      %c0_21 = arith.constant 0 : index
      %23 = vector.load %arg7[%c0_20, %c0_21] : memref<128x128xf32, #tpu.memory_space<vmem>>, vector<128x128xf32>
      tpu.vector_store %arg7[%c0_20, %c0_21], %22 {strides = array<i32>} : memref<128x128xf32, #tpu.memory_space<vmem>>, vector<128x128xf32>,
    } else {
    }
    return
  }
  func.func @transform_0(%arg0: i32, %arg1: i32) -> (i32, i32) {
    %c0_i32 = arith.constant 0 : i32
    %c0_i32_0 = arith.constant 0 : i32
    return %arg0, %c0_i32 : i32, i32
  }
  func.func @transform_1(%arg0: i32, %arg1: i32) -> (i32, i32) {
    %c0_i32 = arith.constant 0 : i32
    %c0_i32_0 = arith.constant 0 : i32
    return %c0_i32, %arg1 : i32, i32
  }
  func.func @transform_2(%arg0: i32, %arg1: i32) -> (i32, i32) {
    %c0_i32 = arith.constant 0 : i32
    %c0_i32_0 = arith.constant 0 : i32
    return %c0_i32, %arg1 : i32, i32
  }
  func.func @transform_3(%arg0: i32, %arg1: i32) -> (i32, i32) {
    %c0_i32 = arith.constant 0 : i32
    %c0_i32_0 = arith.constant 0 : i32
    return %arg1, %c0_i32 : i32, i32
  }
  func.func @transform_4(%arg0: i32, %arg1: i32) -> (i32, i32) {
    %c0_i32 = arith.constant 0 : i32
    %c0_i32_0 = arith.constant 0 : i32
    %c0_i32_1 = arith.constant 0 : i32
    return %c0_i32, %c0_i32_0 : i32, i32
  }
  func.func @transform_5(%arg0: i32, %arg1: i32) -> (i32, i32) {
    %c0_i32 = arith.constant 0 : i32
    %c0_i32_0 = arith.constant 0 : i32
    return %arg0, %c0_i32 : i32, i32
  }
}

</mosaic_0001>

<llo_original>
// kernel: tpu_custom_call.1
$region0: #{tpu_custom_call.1}
  #allocation0 [shape = 'u32[]', space=smem, size = 0x4, offset = 0x4, fixed_abs, tag = 'smem constant byte address 0x4 - core index']
  #allocation1 [shape = 'u32[72,128]{1,0:T(1,128)}', space=vmem, size = 0x9000, scoped, tag = 'internal scratch']
  %s0 = inlined_call_operand.hbm [shape: f32[128,128], index: 0, kind: input, shape index: {}]
  %s1 = inlined_call_operand.hbm [shape: f32[128,256], index: 1, kind: input, shape index: {}]
  %s2 = inlined_call_operand.hbm [shape: f32[1,256], index: 2, kind: input, shape index: {}]
  %s3 = inlined_call_operand.hbm [shape: f32[256,128], index: 3, kind: input, shape index: {}]
  %s4 = inlined_call_operand.vmem [shape: f32[1,128], index: 4, kind: input, shape index: {}]
  %s5 = inlined_call_operand.hbm [shape: f32[128,128], index: 5, kind: output, shape index: {}]
  %s6 = sld [smem:[#allocation0]]
  $region54: #{tpu_custom_call.1} parent=0
    _
  %s8 = ssub.s32 1, %s6
  %s9 = scalar_select 0, %s8, %s6
  $region1: #{tpu_custom_call.1} parent=0
    #allocation2 [shape = 'u8[65536]{0}', space=vmem, size = 0x10000, scoped, tag = 'input window, operand 0, single buffered']
    #allocation3 [shape = 's32[1]{0}', space=sflag, size = 0x4, scoped, tag = 'scoped memory for tpu_custom_call.1']
    #allocation4 [shape = 's32[1]{0}', space=sflag, size = 0x4, scoped, tag = 'scoped memory for tpu_custom_call.1']
    #allocation5 [shape = 'u8[131072]{0}', space=vmem, size = 0x20000, scoped, tag = 'input window, operand 1, single buffered']
    #allocation6 [shape = 's32[1]{0}', space=sflag, size = 0x4, scoped, tag = 'scoped memory for tpu_custom_call.1']
    #allocation7 [shape = 'u8[1024]{0}', space=vmem, size = 0x400, scoped, tag = 'input window, operand 2, single buffered']
    #allocation8 [shape = 'u8[131072]{0}', space=vmem, size = 0x20000, scoped, tag = 'input window, operand 3, single buffered']
    #allocation9 [shape = 's32[1]{0}', space=sflag, size = 0x4, scoped, tag = 'scoped memory for tpu_custom_call.1']
    #allocation10 [shape = 'u8[65536]{0}', space=vmem, size = 0x10000, scoped, tag = 'output window, operand 0, single buffered']
    %10 = vsyncpa [#allocation3], 0
    %11 = vsyncpa [#allocation6], 0
    %12 = vsyncpa [#allocation9], 0
    %13 = vsyncpa [#allocation4], 0
    // Predicated region
    $region2: #{tpu_custom_call.1} parent=1 // pred_check
      _
    $region3: #{tpu_custom_call.1} parent=1 // pred_check_branch
      %15 = sbr.rel (0) target = $region5
    $region4: #{tpu_custom_call.1} parent=1 // pred_region
      %17 = vsyncadd [#allocation3], 0
      %s18 = sshll.u32 %s0, 4
      %s19 = int_to_ptr.hbm [resolvable:$true] %s18
      %s20 = sshll.u32 [#allocation2], 4
      %s21 = int_to_ptr.vmem [resolvable:$true] %s20
      %26 = dma.hbm_to_vmem [thread:$0]  %s19, 2048, %s21, [#allocation3], 128, 128, 8
    $region5: #{tpu_custom_call.1} parent=1 // pred_fallthru
      _
    // Predicated region
    $region6: #{tpu_custom_call.1} parent=1 // pred_check
      _
    $region7: #{tpu_custom_call.1} parent=1 // pred_check_branch
      %28 = sbr.rel (0) target = $region9
    $region8: #{tpu_custom_call.1} parent=1 // pred_region
      %30 = vsyncadd [#allocation6], 0
      %s31 = sshll.u32 %s1, 4
      %s32 = int_to_ptr.hbm [resolvable:$true] %s31
      %s33 = sshll.u32 [#allocation5], 4
      %s34 = int_to_ptr.vmem [resolvable:$true] %s33
      %39 = dma.hbm_to_vmem [thread:$0]  %s32, 4096, %s34, [#allocation6], 256, 256, 16
    $region9: #{tpu_custom_call.1} parent=1 // pred_fallthru
      _
    // Predicated region
    $region10: #{tpu_custom_call.1} parent=1 // pred_check
      _
    $region11: #{tpu_custom_call.1} parent=1 // pred_check_branch
      %41 = sbr.rel (0) target = $region13
    $region12: #{tpu_custom_call.1} parent=1 // pred_region
      %43 = vsyncadd [#allocation6], 0
      %s45 = sshll.u32 %s2, 4
      %s46 = int_to_ptr.hbm [resolvable:$true] %s45
      %s47 = sshll.u32 [#allocation7], 4
      %s48 = int_to_ptr.vmem [resolvable:$true] %s47
      %50 = dma.hbm_to_vmem [thread:$0]  %s46, 32, %s48, [#allocation6]
    $region13: #{tpu_custom_call.1} parent=1 // pred_fallthru
      _
    // Predicated region
    $region14: #{tpu_custom_call.1} parent=1 // pred_check
      _
    $region15: #{tpu_custom_call.1} parent=1 // pred_check_branch
      %52 = sbr.rel (0) target = $region17
    $region16: #{tpu_custom_call.1} parent=1 // pred_region
      %54 = vsyncadd [#allocation9], 0
      %s55 = sshll.u32 %s3, 4
      %s56 = int_to_ptr.hbm [resolvable:$true] %s55
      %s57 = sshll.u32 [#allocation8], 4
      %s58 = int_to_ptr.vmem [resolvable:$true] %s57
      %63 = dma.hbm_to_vmem [thread:$0]  %s56, 4096, %s58, [#allocation9], 128, 128, 8
    $region17: #{tpu_custom_call.1} parent=1 // pred_fallthru
      _
    // Predicated region
    $region18: #{tpu_custom_call.1} parent=1 // pred_check
      _
    $region19: #{tpu_custom_call.1} parent=1 // pred_check_branch
      %65 = sbr.rel (0) target = $region21
    $region20: #{tpu_custom_call.1} parent=1 // pred_region
      _
    $region21: #{tpu_custom_call.1} parent=1 // pred_fallthru
      _
    // Predicated region
    $region22: #{tpu_custom_call.1} parent=1 // pred_check
      _
    $region23: #{tpu_custom_call.1} parent=1 // pred_check_branch
      %67 = sbr.rel (0) target = $region25
    $region24: #{tpu_custom_call.1} parent=1 // pred_region
      %69 = dma.done [#allocation3], 2048
    $region25: #{tpu_custom_call.1} parent=1 // pred_fallthru
      _
    // Predicated region
    $region26: #{tpu_custom_call.1} parent=1 // pred_check
      _
    $region27: #{tpu_custom_call.1} parent=1 // pred_check_branch
      %71 = sbr.rel (0) target = $region29
    $region28: #{tpu_custom_call.1} parent=1 // pred_region
      %73 = dma.done [#allocation6], 4096
    $region29: #{tpu_custom_call.1} parent=1 // pred_fallthru
      _
    // Predicated region
    $region30: #{tpu_custom_call.1} parent=1 // pred_check
      _
    $region31: #{tpu_custom_call.1} parent=1 // pred_check_branch
      %75 = sbr.rel (0) target = $region33
    $region32: #{tpu_custom_call.1} parent=1 // pred_region
      %77 = dma.done [#allocation6], 32
    $region33: #{tpu_custom_call.1} parent=1 // pred_fallthru
      _
    // Predicated region
    $region34: #{tpu_custom_call.1} parent=1 // pred_check
      _
    $region35: #{tpu_custom_call.1} parent=1 // pred_check_branch
      %79 = sbr.rel (0) target = $region37
    $region36: #{tpu_custom_call.1} parent=1 // pred_region
      %81 = dma.done [#allocation9], 4096
    $region37: #{tpu_custom_call.1} parent=1 // pred_fallthru
      _
    %p82 = scmp.eq.s32.totalorder 0, 0
    // Predicated region
    $region38: #{tpu_custom_call.1} parent=1 // pred_check
      %p83 = pneg %p82
    $region39: #{tpu_custom_call.1} parent=1 // pred_check_branch
      %85 = sbr.rel (%p83) target = $region41
    $region40: #{tpu_custom_call.1} parent=1 // pred_region
      %86 = vst [vmem:[#allocation10] sm:$0xff] 0.0
      %87 = vst [vmem:[#allocation10 + $0x8] sm:$0xff] 0.0
      %88 = vst [vmem:[#allocation10 + $0x10] sm:$0xff] 0.0
      %89 = vst [vmem:[#allocation10 + $0x18] sm:$0xff] 0.0
      %90 = vst [vmem:[#allocation10 + $0x20] sm:$0xff] 0.0
      %91 = vst [vmem:[#allocation10 + $0x28] sm:$0xff] 0.0
      %92 = vst [vmem:[#allocation10 + $0x30] sm:$0xff] 0.0
      %93 = vst [vmem:[#allocation10 + $0x38] sm:$0xff] 0.0
      %94 = vst [vmem:[#allocation10 + $0x40] sm:$0xff] 0.0
      %95 = vst [vmem:[#allocation10 + $0x48] sm:$0xff] 0.0
      %96 = vst [vmem:[#allocation10 + $0x50] sm:$0xff] 0.0
      %97 = vst [vmem:[#allocation10 + $0x58] sm:$0xff] 0.0
      %98 = vst [vmem:[#allocation10 + $0x60] sm:$0xff] 0.0
      %99 = vst [vmem:[#allocation10 + $0x68] sm:$0xff] 0.0
      %100 = vst [vmem:[#allocation10 + $0x70] sm:$0xff] 0.0
      %101 = vst [vmem:[#allocation10 + $0x78] sm:$0xff] 0.0
    $region41: #{tpu_custom_call.1} parent=1 // pred_fallthru
      _
    %v102 = vld [vmem:[#allocation2] sm:$0xff]
    %v103 = vld [vmem:[#allocation2 + $0x8] sm:$0xff]
    %v104 = vld [vmem:[#allocation2 + $0x10] sm:$0xff]
    %v105 = vld [vmem:[#allocation2 + $0x18] sm:$0xff]
    %v106 = vld [vmem:[#allocation2 + $0x20] sm:$0xff]
    %v107 = vld [vmem:[#allocation2 + $0x28] sm:$0xff]
    %v108 = vld [vmem:[#allocation2 + $0x30] sm:$0xff]
    %v109 = vld [vmem:[#allocation2 + $0x38] sm:$0xff]
    %v110 = vld [vmem:[#allocation2 + $0x40] sm:$0xff]
    %v111 = vld [vmem:[#allocation2 + $0x48] sm:$0xff]
    %v112 = vld [vmem:[#allocation2 + $0x50] sm:$0xff]
    %v113 = vld [vmem:[#allocation2 + $0x58] sm:$0xff]
    %v114 = vld [vmem:[#allocation2 + $0x60] sm:$0xff]
    %v115 = vld [vmem:[#allocation2 + $0x68] sm:$0xff]
    %v116 = vld [vmem:[#allocation2 + $0x70] sm:$0xff]
    %v117 = vld [vmem:[#allocation2 + $0x78] sm:$0xff]
    %v118 = vld [vmem:[#allocation5] sm:$0xff]
    %v119 = vld [vmem:[#allocation5 + $0x8] sm:$0xff]
    %v120 = vld [vmem:[#allocation5 + $0x10] sm:$0xff]
    %v121 = vld [vmem:[#allocation5 + $0x18] sm:$0xff]
    %v122 = vld [vmem:[#allocation5 + $0x20] sm:$0xff]
    %v123 = vld [vmem:[#allocation5 + $0x28] sm:$0xff]
    %v124 = vld [vmem:[#allocation5 + $0x30] sm:$0xff]
    %v125 = vld [vmem:[#allocation5 + $0x38] sm:$0xff]
    %v126 = vld [vmem:[#allocation5 + $0x40] sm:$0xff]
    %v127 = vld [vmem:[#allocation5 + $0x48] sm:$0xff]
    %v128 = vld [vmem:[#allocation5 + $0x50] sm:$0xff]
    %v129 = vld [vmem:[#allocation5 + $0x58] sm:$0xff]
    %v130 = vld [vmem:[#allocation5 + $0x60] sm:$0xff]
    %v131 = vld [vmem:[#allocation5 + $0x68] sm:$0xff]
    %v132 = vld [vmem:[#allocation5 + $0x70] sm:$0xff]
    %v133 = vld [vmem:[#allocation5 + $0x78] sm:$0xff]
    %v134 = vld [vmem:[#allocation5 + $0x80] sm:$0xff]
    %v135 = vld [vmem:[#allocation5 + $0x88] sm:$0xff]
    %v136 = vld [vmem:[#allocation5 + $0x90] sm:$0xff]
    %v137 = vld [vmem:[#allocation5 + $0x98] sm:$0xff]
    %v138 = vld [vmem:[#allocation5 + $0xa0] sm:$0xff]
    %v139 = vld [vmem:[#allocation5 + $0xa8] sm:$0xff]
    %v140 = vld [vmem:[#allocation5 + $0xb0] sm:$0xff]
    %v141 = vld [vmem:[#allocation5 + $0xb8] sm:$0xff]
    %v142 = vld [vmem:[#allocation5 + $0xc0] sm:$0xff]
    %v143 = vld [vmem:[#allocation5 + $0xc8] sm:$0xff]
    %v144 = vld [vmem:[#allocation5 + $0xd0] sm:$0xff]
    %v145 = vld [vmem:[#allocation5 + $0xd8] sm:$0xff]
    %v146 = vld [vmem:[#allocation5 + $0xe0] sm:$0xff]
    %v147 = vld [vmem:[#allocation5 + $0xe8] sm:$0xff]
    %v148 = vld [vmem:[#allocation5 + $0xf0] sm:$0xff]
    %v149 = vld [vmem:[#allocation5 + $0xf8] sm:$0xff]
    %v150 = vld [vmem:[#allocation7] sm:$0x3]
    %v152 = vperm.slane %v150, 0
    %v153 = vperm.slane %v150, 1
    %156 = vmatpush.msra.mxu0 %v148
    %157 = vmatpush.msra.mxu0 %v146
    %158 = vmatpush.msra.mxu0 %v144
    %159 = vmatpush.msra.mxu0 %v142
    %160 = vmatpush.msra.mxu0 %v140
    %161 = vmatpush.msra.mxu0 %v138
    %162 = vmatpush.msra.mxu0 %v136
    %163 = vmatpush.msra.mxu0 %v134
    %164 = vmatpush.msra.mxu0 %v132
    %165 = vmatpush.msra.mxu0 %v130
    %166 = vmatpush.msra.mxu0 %v128
    %167 = vmatpush.msra.mxu0 %v126
    %168 = vmatpush.msra.mxu0 %v124
    %169 = vmatpush.msra.mxu0 %v122
    %170 = vmatpush.msra.mxu0 %v120
    %171 = vmatpush.msra.mxu0 %v118
    %172 = vmatmul.f32.gmra.mxu0 %v102
    %v173 = vpop.f32.mrf.mxu0
    %v174 = vadd.f32 %v152, %v173
    %175 = vmatmul.f32.gmra.mxu0 %v103
    %v176 = vpop.f32.mrf.mxu0
    %v177 = vadd.f32 %v152, %v176
    %178 = vmatmul.f32.gmra.mxu0 %v104
    %v179 = vpop.f32.mrf.mxu0
    %v180 = vadd.f32 %v152, %v179
    %181 = vmatmul.f32.gmra.mxu0 %v105
    %v182 = vpop.f32.mrf.mxu0
    %v183 = vadd.f32 %v152, %v182
    %184 = vmatmul.f32.gmra.mxu0 %v106
    %v185 = vpop.f32.mrf.mxu0
    %v186 = vadd.f32 %v152, %v185
    %187 = vmatmul.f32.gmra.mxu0 %v107
    %v188 = vpop.f32.mrf.mxu0
    %v189 = vadd.f32 %v152, %v188
    %190 = vmatmul.f32.gmra.mxu0 %v108
    %v191 = vpop.f32.mrf.mxu0
    %v192 = vadd.f32 %v152, %v191
    %193 = vmatmul.f32.gmra.mxu0 %v109
    %v194 = vpop.f32.mrf.mxu0
    %v195 = vadd.f32 %v152, %v194
    %196 = vmatmul.f32.gmra.mxu0 %v110
    %v197 = vpop.f32.mrf.mxu0
    %v198 = vadd.f32 %v152, %v197
    %199 = vmatmul.f32.gmra.mxu0 %v111
    %v200 = vpop.f32.mrf.mxu0
    %v201 = vadd.f32 %v152, %v200
    %202 = vmatmul.f32.gmra.mxu0 %v112
    %v203 = vpop.f32.mrf.mxu0
    %v204 = vadd.f32 %v152, %v203
    %205 = vmatmul.f32.gmra.mxu0 %v113
    %v206 = vpop.f32.mrf.mxu0
    %v207 = vadd.f32 %v152, %v206
    %208 = vmatmul.f32.gmra.mxu0 %v114
    %v209 = vpop.f32.mrf.mxu0
    %v210 = vadd.f32 %v152, %v209
    %211 = vmatmul.f32.gmra.mxu0 %v115
    %v212 = vpop.f32.mrf.mxu0
    %v213 = vadd.f32 %v152, %v212
    %214 = vmatmul.f32.gmra.mxu0 %v116
    %v215 = vpop.f32.mrf.mxu0
    %v216 = vadd.f32 %v152, %v215
    %217 = vmatmul.f32.gmra.mxu0 %v117
    %v218 = vpop.f32.mrf.mxu0
    %v219 = vadd.f32 %v152, %v218
    %220 = vdwg.mxu0
    %221 = vmatpush.msra.mxu0 %v149
    %222 = vmatpush.msra.mxu0 %v147
    %223 = vmatpush.msra.mxu0 %v145
    %224 = vmatpush.msra.mxu0 %v143
    %225 = vmatpush.msra.mxu0 %v141
    %226 = vmatpush.msra.mxu0 %v139
    %227 = vmatpush.msra.mxu0 %v137
    %228 = vmatpush.msra.mxu0 %v135
    %229 = vmatpush.msra.mxu0 %v133
    %230 = vmatpush.msra.mxu0 %v131
    %231 = vmatpush.msra.mxu0 %v129
    %232 = vmatpush.msra.mxu0 %v127
    %233 = vmatpush.msra.mxu0 %v125
    %234 = vmatpush.msra.mxu0 %v123
    %235 = vmatpush.msra.mxu0 %v121
    %236 = vmatpush.msra.mxu0 %v119
    %237 = vmatmul.f32.gmra.mxu0 %v102
    %v238 = vpop.f32.mrf.mxu0
    %v239 = vadd.f32 %v153, %v238
    %240 = vmatmul.f32.gmra.mxu0 %v103
    %v241 = vpop.f32.mrf.mxu0
    %v242 = vadd.f32 %v153, %v241
    %243 = vmatmul.f32.gmra.mxu0 %v104
    %v244 = vpop.f32.mrf.mxu0
    %v245 = vadd.f32 %v153, %v244
    %246 = vmatmul.f32.gmra.mxu0 %v105
    %v247 = vpop.f32.mrf.mxu0
    %v248 = vadd.f32 %v153, %v247
    %249 = vmatmul.f32.gmra.mxu0 %v106
    %v250 = vpop.f32.mrf.mxu0
    %v251 = vadd.f32 %v153, %v250
    %252 = vmatmul.f32.gmra.mxu0 %v107
    %v253 = vpop.f32.mrf.mxu0
    %v254 = vadd.f32 %v153, %v253
    %255 = vmatmul.f32.gmra.mxu0 %v108
    %v256 = vpop.f32.mrf.mxu0
    %v257 = vadd.f32 %v153, %v256
    %258 = vmatmul.f32.gmra.mxu0 %v109
    %v259 = vpop.f32.mrf.mxu0
    %v260 = vadd.f32 %v153, %v259
    %261 = vmatmul.f32.gmra.mxu0 %v110
    %v262 = vpop.f32.mrf.mxu0
    %v263 = vadd.f32 %v153, %v262
    %264 = vmatmul.f32.gmra.mxu0 %v111
    %v265 = vpop.f32.mrf.mxu0
    %v266 = vadd.f32 %v153, %v265
    %267 = vmatmul.f32.gmra.mxu0 %v112
    %v268 = vpop.f32.mrf.mxu0
    %v269 = vadd.f32 %v153, %v268
    %270 = vmatmul.f32.gmra.mxu0 %v113
    %v271 = vpop.f32.mrf.mxu0
    %v272 = vadd.f32 %v153, %v271
    %273 = vmatmul.f32.gmra.mxu0 %v114
    %v274 = vpop.f32.mrf.mxu0
    %v275 = vadd.f32 %v153, %v274
    %276 = vmatmul.f32.gmra.mxu0 %v115
    %v277 = vpop.f32.mrf.mxu0
    %v278 = vadd.f32 %v153, %v277
    %279 = vmatmul.f32.gmra.mxu0 %v116
    %v280 = vpop.f32.mrf.mxu0
    %v281 = vadd.f32 %v153, %v280
    %282 = vmatmul.f32.gmra.mxu0 %v117
    %v283 = vpop.f32.mrf.mxu0
    %v284 = vadd.f32 %v153, %v283
    %285 = vdwg.mxu0
    %v286 = vmax.f32 %v174, 0.0
    %v287 = vmax.f32 %v239, 0.0
    %v288 = vmax.f32 %v177, 0.0
    %v289 = vmax.f32 %v242, 0.0
    %v290 = vmax.f32 %v180, 0.0
    %v291 = vmax.f32 %v245, 0.0
    %v292 = vmax.f32 %v183, 0.0
    %v293 = vmax.f32 %v248, 0.0
    %v294 = vmax.f32 %v186, 0.0
    %v295 = vmax.f32 %v251, 0.0
    %v296 = vmax.f32 %v189, 0.0
    %v297 = vmax.f32 %v254, 0.0
    %v298 = vmax.f32 %v192, 0.0
    %v299 = vmax.f32 %v257, 0.0
    %v300 = vmax.f32 %v195, 0.0
    %v301 = vmax.f32 %v260, 0.0
    %v302 = vmax.f32 %v198, 0.0
    %v303 = vmax.f32 %v263, 0.0
    %v304 = vmax.f32 %v201, 0.0
    %v305 = vmax.f32 %v266, 0.0
    %v306 = vmax.f32 %v204, 0.0
    %v307 = vmax.f32 %v269, 0.0
    %v308 = vmax.f32 %v207, 0.0
    %v309 = vmax.f32 %v272, 0.0
    %v310 = vmax.f32 %v210, 0.0
    %v311 = vmax.f32 %v275, 0.0
    %v312 = vmax.f32 %v213, 0.0
    %v313 = vmax.f32 %v278, 0.0
    %v314 = vmax.f32 %v216, 0.0
    %v315 = vmax.f32 %v281, 0.0
    %v316 = vmax.f32 %v219, 0.0
    %v317 = vmax.f32 %v284, 0.0
    %v318 = vld [vmem:[#allocation10] sm:$0xff]
    %v319 = vld [vmem:[#allocation10 + $0x8] sm:$0xff]
    %v320 = vld [vmem:[#allocation10 + $0x10] sm:$0xff]
    %v321 = vld [vmem:[#allocation10 + $0x18] sm:$0xff]
    %v322 = vld [vmem:[#allocation10 + $0x20] sm:$0xff]
    %v323 = vld [vmem:[#allocation10 + $0x28] sm:$0xff]
    %v324 = vld [vmem:[#allocation10 + $0x30] sm:$0xff]
    %v325 = vld [vmem:[#allocation10 + $0x38] sm:$0xff]
    %v326 = vld [vmem:[#allocation10 + $0x40] sm:$0xff]
    %v327 = vld [vmem:[#allocation10 + $0x48] sm:$0xff]
    %v328 = vld [vmem:[#allocation10 + $0x50] sm:$0xff]
    %v329 = vld [vmem:[#allocation10 + $0x58] sm:$0xff]
    %v330 = vld [vmem:[#allocation10 + $0x60] sm:$0xff]
    %v331 = vld [vmem:[#allocation10 + $0x68] sm:$0xff]
    %v332 = vld [vmem:[#allocation10 + $0x70] sm:$0xff]
    %v333 = vld [vmem:[#allocation10 + $0x78] sm:$0xff]
    %v334 = vld [vmem:[#allocation8] sm:$0xff]
    %v335 = vld [vmem:[#allocation8 + $0x8] sm:$0xff]
    %v336 = vld [vmem:[#allocation8 + $0x10] sm:$0xff]
    %v337 = vld [vmem:[#allocation8 + $0x18] sm:$0xff]
    %v338 = vld [vmem:[#allocation8 + $0x20] sm:$0xff]
    %v339 = vld [vmem:[#allocation8 + $0x28] sm:$0xff]
    %v340 = vld [vmem:[#allocation8 + $0x30] sm:$0xff]
    %v341 = vld [vmem:[#allocation8 + $0x38] sm:$0xff]
    %v342 = vld [vmem:[#allocation8 + $0x40] sm:$0xff]
    %v343 = vld [vmem:[#allocation8 + $0x48] sm:$0xff]
    %v344 = vld [vmem:[#allocation8 + $0x50] sm:$0xff]
    %v345 = vld [vmem:[#allocation8 + $0x58] sm:$0xff]
    %v346 = vld [vmem:[#allocation8 + $0x60] sm:$0xff]
    %v347 = vld [vmem:[#allocation8 + $0x68] sm:$0xff]
    %v348 = vld [vmem:[#allocation8 + $0x70] sm:$0xff]
    %v349 = vld [vmem:[#allocation8 + $0x78] sm:$0xff]
    %v350 = vld [vmem:[#allocation8 + $0x80] sm:$0xff]
    %v351 = vld [vmem:[#allocation8 + $0x88] sm:$0xff]
    %v352 = vld [vmem:[#allocation8 + $0x90] sm:$0xff]
    %v353 = vld [vmem:[#allocation8 + $0x98] sm:$0xff]
    %v354 = vld [vmem:[#allocation8 + $0xa0] sm:$0xff]
    %v355 = vld [vmem:[#allocation8 + $0xa8] sm:$0xff]
    %v356 = vld [vmem:[#allocation8 + $0xb0] sm:$0xff]
    %v357 = vld [vmem:[#allocation8 + $0xb8] sm:$0xff]
    %v358 = vld [vmem:[#allocation8 + $0xc0] sm:$0xff]
    %v359 = vld [vmem:[#allocation8 + $0xc8] sm:$0xff]
    %v360 = vld [vmem:[#allocation8 + $0xd0] sm:$0xff]
    %v361 = vld [vmem:[#allocation8 + $0xd8] sm:$0xff]
    %v362 = vld [vmem:[#allocation8 + $0xe0] sm:$0xff]
    %v363 = vld [vmem:[#allocation8 + $0xe8] sm:$0xff]
    %v364 = vld [vmem:[#allocation8 + $0xf0] sm:$0xff]
    %v365 = vld [vmem:[#allocation8 + $0xf8] sm:$0xff]
    %366 = vmatpush.msra.mxu0 %v349
    %367 = vmatpush.msra.mxu0 %v348
    %368 = vmatpush.msra.mxu0 %v347
    %369 = vmatpush.msra.mxu0 %v346
    %370 = vmatpush.msra.mxu0 %v345
    %371 = vmatpush.msra.mxu0 %v344
    %372 = vmatpush.msra.mxu0 %v343
    %373 = vmatpush.msra.mxu0 %v342
    %374 = vmatpush.msra.mxu0 %v341
    %375 = vmatpush.msra.mxu0 %v340
    %376 = vmatpush.msra.mxu0 %v339
    %377 = vmatpush.msra.mxu0 %v338
    %378 = vmatpush.msra.mxu0 %v337
    %379 = vmatpush.msra.mxu0 %v336
    %380 = vmatpush.msra.mxu0 %v335
    %381 = vmatpush.msra.mxu0 %v334
    %382 = vmatmul.f32.gmra.mxu0 %v286
    %v383 = vpop.f32.mrf.mxu0
    %v384 = vadd.f32 0.0, %v383
    %385 = vmatmul.f32.gmra.mxu0 %v288
    %v386 = vpop.f32.mrf.mxu0
    %v387 = vadd.f32 0.0, %v386
    %388 = vmatmul.f32.gmra.mxu0 %v290
    %v389 = vpop.f32.mrf.mxu0
    %v390 = vadd.f32 0.0, %v389
    %391 = vmatmul.f32.gmra.mxu0 %v292
    %v392 = vpop.f32.mrf.mxu0
    %v393 = vadd.f32 0.0, %v392
    %394 = vmatmul.f32.gmra.mxu0 %v294
    %v395 = vpop.f32.mrf.mxu0
    %v396 = vadd.f32 0.0, %v395
    %397 = vmatmul.f32.gmra.mxu0 %v296
    %v398 = vpop.f32.mrf.mxu0
    %v399 = vadd.f32 0.0, %v398
    %400 = vmatmul.f32.gmra.mxu0 %v298
    %v401 = vpop.f32.mrf.mxu0
    %v402 = vadd.f32 0.0, %v401
    %403 = vmatmul.f32.gmra.mxu0 %v300
    %v404 = vpop.f32.mrf.mxu0
    %v405 = vadd.f32 0.0, %v404
    %406 = vmatmul.f32.gmra.mxu0 %v302
    %v407 = vpop.f32.mrf.mxu0
    %v408 = vadd.f32 0.0, %v407
    %409 = vmatmul.f32.gmra.mxu0 %v304
    %v410 = vpop.f32.mrf.mxu0
    %v411 = vadd.f32 0.0, %v410
    %412 = vmatmul.f32.gmra.mxu0 %v306
    %v413 = vpop.f32.mrf.mxu0
    %v414 = vadd.f32 0.0, %v413
    %415 = vmatmul.f32.gmra.mxu0 %v308
    %v416 = vpop.f32.mrf.mxu0
    %v417 = vadd.f32 0.0, %v416
    %418 = vmatmul.f32.gmra.mxu0 %v310
    %v419 = vpop.f32.mrf.mxu0
    %v420 = vadd.f32 0.0, %v419
    %421 = vmatmul.f32.gmra.mxu0 %v312
    %v422 = vpop.f32.mrf.mxu0
    %v423 = vadd.f32 0.0, %v422
    %424 = vmatmul.f32.gmra.mxu0 %v314
    %v425 = vpop.f32.mrf.mxu0
    %v426 = vadd.f32 0.0, %v425
    %427 = vmatmul.f32.gmra.mxu0 %v316
    %v428 = vpop.f32.mrf.mxu0
    %v429 = vadd.f32 0.0, %v428
    %430 = vdwg.mxu0
    %431 = vmatpush.msra.mxu0 %v365
    %432 = vmatpush.msra.mxu0 %v364
    %433 = vmatpush.msra.mxu0 %v363
    %434 = vmatpush.msra.mxu0 %v362
    %435 = vmatpush.msra.mxu0 %v361
    %436 = vmatpush.msra.mxu0 %v360
    %437 = vmatpush.msra.mxu0 %v359
    %438 = vmatpush.msra.mxu0 %v358
    %439 = vmatpush.msra.mxu0 %v357
    %440 = vmatpush.msra.mxu0 %v356
    %441 = vmatpush.msra.mxu0 %v355
    %442 = vmatpush.msra.mxu0 %v354
    %443 = vmatpush.msra.mxu0 %v353
    %444 = vmatpush.msra.mxu0 %v352
    %445 = vmatpush.msra.mxu0 %v351
    %446 = vmatpush.msra.mxu0 %v350
    %447 = vmatmul.f32.gmra.mxu0 %v287
    %v448 = vpop.f32.mrf.mxu0
    %v449 = vadd.f32 %v384, %v448
    %450 = vmatmul.f32.gmra.mxu0 %v289
    %v451 = vpop.f32.mrf.mxu0
    %v452 = vadd.f32 %v387, %v451
    %453 = vmatmul.f32.gmra.mxu0 %v291
    %v454 = vpop.f32.mrf.mxu0
    %v455 = vadd.f32 %v390, %v454
    %456 = vmatmul.f32.gmra.mxu0 %v293
    %v457 = vpop.f32.mrf.mxu0
    %v458 = vadd.f32 %v393, %v457
    %459 = vmatmul.f32.gmra.mxu0 %v295
    %v460 = vpop.f32.mrf.mxu0
    %v461 = vadd.f32 %v396, %v460
    %462 = vmatmul.f32.gmra.mxu0 %v297
    %v463 = vpop.f32.mrf.mxu0
    %v464 = vadd.f32 %v399, %v463
    %465 = vmatmul.f32.gmra.mxu0 %v299
    %v466 = vpop.f32.mrf.mxu0
    %v467 = vadd.f32 %v402, %v466
    %468 = vmatmul.f32.gmra.mxu0 %v301
    %v469 = vpop.f32.mrf.mxu0
    %v470 = vadd.f32 %v405, %v469
    %471 = vmatmul.f32.gmra.mxu0 %v303
    %v472 = vpop.f32.mrf.mxu0
    %v473 = vadd.f32 %v408, %v472
    %474 = vmatmul.f32.gmra.mxu0 %v305
    %v475 = vpop.f32.mrf.mxu0
    %v476 = vadd.f32 %v411, %v475
    %477 = vmatmul.f32.gmra.mxu0 %v307
    %v478 = vpop.f32.mrf.mxu0
    %v479 = vadd.f32 %v414, %v478
    %480 = vmatmul.f32.gmra.mxu0 %v309
    %v481 = vpop.f32.mrf.mxu0
    %v482 = vadd.f32 %v417, %v481
    %483 = vmatmul.f32.gmra.mxu0 %v311
    %v484 = vpop.f32.mrf.mxu0
    %v485 = vadd.f32 %v420, %v484
    %486 = vmatmul.f32.gmra.mxu0 %v313
    %v487 = vpop.f32.mrf.mxu0
    %v488 = vadd.f32 %v423, %v487
    %489 = vmatmul.f32.gmra.mxu0 %v315
    %v490 = vpop.f32.mrf.mxu0
    %v491 = vadd.f32 %v426, %v490
    %492 = vmatmul.f32.gmra.mxu0 %v317
    %v493 = vpop.f32.mrf.mxu0
    %v494 = vadd.f32 %v429, %v493
    %495 = vdwg.mxu0
    %v496 = vadd.f32 %v318, %v449
    %v497 = vadd.f32 %v319, %v452
    %v498 = vadd.f32 %v320, %v455
    %v499 = vadd.f32 %v321, %v458
    %v500 = vadd.f32 %v322, %v461
    %v501 = vadd.f32 %v323, %v464
    %v502 = vadd.f32 %v324, %v467
    %v503 = vadd.f32 %v325, %v470
    %v504 = vadd.f32 %v326, %v473
    %v505 = vadd.f32 %v327, %v476
    %v506 = vadd.f32 %v328, %v479
    %v507 = vadd.f32 %v329, %v482
    %v508 = vadd.f32 %v330, %v485
    %v509 = vadd.f32 %v331, %v488
    %v510 = vadd.f32 %v332, %v491
    %v511 = vadd.f32 %v333, %v494
    %512 = vst [vmem:[#allocation10] sm:$0xff] %v496
    %513 = vst [vmem:[#allocation10 + $0x8] sm:$0xff] %v497
    %514 = vst [vmem:[#allocation10 + $0x10] sm:$0xff] %v498
    %515 = vst [vmem:[#allocation10 + $0x18] sm:$0xff] %v499
    %516 = vst [vmem:[#allocation10 + $0x20] sm:$0xff] %v500
    %517 = vst [vmem:[#allocation10 + $0x28] sm:$0xff] %v501
    %518 = vst [vmem:[#allocation10 + $0x30] sm:$0xff] %v502
    %519 = vst [vmem:[#allocation10 + $0x38] sm:$0xff] %v503
    %520 = vst [vmem:[#allocation10 + $0x40] sm:$0xff] %v504
    %521 = vst [vmem:[#allocation10 + $0x48] sm:$0xff] %v505
    %522 = vst [vmem:[#allocation10 + $0x50] sm:$0xff] %v506
    %523 = vst [vmem:[#allocation10 + $0x58] sm:$0xff] %v507
    %524 = vst [vmem:[#allocation10 + $0x60] sm:$0xff] %v508
    %525 = vst [vmem:[#allocation10 + $0x68] sm:$0xff] %v509
    %526 = vst [vmem:[#allocation10 + $0x70] sm:$0xff] %v510
    %527 = vst [vmem:[#allocation10 + $0x78] sm:$0xff] %v511
    // Predicated region
    $region42: #{tpu_custom_call.1} parent=1 // pred_check
      %p528 = pneg %p82
    $region43: #{tpu_custom_call.1} parent=1 // pred_check_branch
      %530 = sbr.rel (%p528) target = $region45
    $region44: #{tpu_custom_call.1} parent=1 // pred_region
      %v531 = vld [vmem:[#allocation10] sm:$0xff]
      %v532 = vld [vmem:[#allocation10 + $0x8] sm:$0xff]
      %v533 = vld [vmem:[#allocation10 + $0x10] sm:$0xff]
      %v534 = vld [vmem:[#allocation10 + $0x18] sm:$0xff]
      %v535 = vld [vmem:[#allocation10 + $0x20] sm:$0xff]
      %v536 = vld [vmem:[#allocation10 + $0x28] sm:$0xff]
      %v537 = vld [vmem:[#allocation10 + $0x30] sm:$0xff]
      %v538 = vld [vmem:[#allocation10 + $0x38] sm:$0xff]
      %v539 = vld [vmem:[#allocation10 + $0x40] sm:$0xff]
      %v540 = vld [vmem:[#allocation10 + $0x48] sm:$0xff]
      %v541 = vld [vmem:[#allocation10 + $0x50] sm:$0xff]
      %v542 = vld [vmem:[#allocation10 + $0x58] sm:$0xff]
      %v543 = vld [vmem:[#allocation10 + $0x60] sm:$0xff]
      %v544 = vld [vmem:[#allocation10 + $0x68] sm:$0xff]
      %v545 = vld [vmem:[#allocation10 + $0x70] sm:$0xff]
      %v546 = vld [vmem:[#allocation10 + $0x78] sm:$0xff]
      %v547 = vld [vmem:[%s4] sm:$0x1]
      %v549 = vperm.slane %v547, 0
      %v551 = vadd.f32 %v531, %v549
      %v552 = vadd.f32 %v532, %v549
      %v553 = vadd.f32 %v533, %v549
      %v554 = vadd.f32 %v534, %v549
      %v555 = vadd.f32 %v535, %v549
      %v556 = vadd.f32 %v536, %v549
      %v557 = vadd.f32 %v537, %v549
      %v558 = vadd.f32 %v538, %v549
      %v559 = vadd.f32 %v539, %v549
      %v560 = vadd.f32 %v540, %v549
      %v561 = vadd.f32 %v541, %v549
      %v562 = vadd.f32 %v542, %v549
      %v563 = vadd.f32 %v543, %v549
      %v564 = vadd.f32 %v544, %v549
      %v565 = vadd.f32 %v545, %v549
      %v566 = vadd.f32 %v546, %v549
      %567 = vst [vmem:[#allocation10] sm:$0xff] %v551
      %568 = vst [vmem:[#allocation10 + $0x8] sm:$0xff] %v552
      %569 = vst [vmem:[#allocation10 + $0x10] sm:$0xff] %v553
      %570 = vst [vmem:[#allocation10 + $0x18] sm:$0xff] %v554
      %571 = vst [vmem:[#allocation10 + $0x20] sm:$0xff] %v555
      %572 = vst [vmem:[#allocation10 + $0x28] sm:$0xff] %v556
      %573 = vst [vmem:[#allocation10 + $0x30] sm:$0xff] %v557
      %574 = vst [vmem:[#allocation10 + $0x38] sm:$0xff] %v558
      %575 = vst [vmem:[#allocation10 + $0x40] sm:$0xff] %v559
      %576 = vst [vmem:[#allocation10 + $0x48] sm:$0xff] %v560
      %577 = vst [vmem:[#allocation10 + $0x50] sm:$0xff] %v561
      %578 = vst [vmem:[#allocation10 + $0x58] sm:$0xff] %v562
      %579 = vst [vmem:[#allocation10 + $0x60] sm:$0xff] %v563
      %580 = vst [vmem:[#allocation10 + $0x68] sm:$0xff] %v564
      %581 = vst [vmem:[#allocation10 + $0x70] sm:$0xff] %v565
      %582 = vst [vmem:[#allocation10 + $0x78] sm:$0xff] %v566
    $region45: #{tpu_custom_call.1} parent=1 // pred_fallthru
      _
    // Predicated region
    $region46: #{tpu_custom_call.1} parent=1 // pred_check
      _
    $region47: #{tpu_custom_call.1} parent=1 // pred_check_branch
      %584 = sbr.rel (0) target = $region49
    $region48: #{tpu_custom_call.1} parent=1 // pred_region
      %586 = vsyncadd [#allocation4], 0
      %s587 = sshll.u32 [#allocation10], 4
      %s588 = int_to_ptr.vmem [resolvable:$true] %s587
      %s589 = sshll.u32 %s5, 4
      %s590 = int_to_ptr.hbm [resolvable:$true] %s589
      %595 = dma.vmem_to_hbm [thread:$0]  %s588, 2048, %s590, [#allocation4], 128, 128, 8
    $region49: #{tpu_custom_call.1} parent=1 // pred_fallthru
      _
    // Predicated region
    $region50: #{tpu_custom_call.1} parent=1 // pred_check
      _
    $region51: #{tpu_custom_call.1} parent=1 // pred_check_branch
      %597 = sbr.rel (0) target = $region53
    $region52: #{tpu_custom_call.1} parent=1 // pred_region
      %599 = dma.done [#allocation4], 2048
    $region53: #{tpu_custom_call.1} parent=1 // pred_fallthru
      _
    %600 = vsyncpa [#allocation3], 1
    %601 = vsyncpa [#allocation6], 1
    %602 = vsyncpa [#allocation9], 1
    %603 = vsyncpa [#allocation4], 1

</llo_original>
